<compile_context>
chip_gen: v7x
topology: tpu7x:2x2x1
jax: 0.10.0
libtpu: 0.0.40
codegen_flags: <defaults>
</compile_context>

<pallas_src>
import functools

import jax
import jax.numpy as jnp
import numpy as np
from jax import lax
from jax.experimental import pallas as pl
from jax.experimental.pallas import tpu as pltpu

_VMEM_LIMIT_BYTES = 32 * 1024 * 1024   # safe on v5e/v6e (128 MiB) and v7x (64 MiB)


def _qkv_projection_kernel(x_ref, w_ref, b_ref, q_ref, k_ref, v_ref, *, c8):
    """Fused (2*C/8 + C, C) @ (C, N) matmul implementing all three 1x1 convs."""
    xc = x_ref[...].astype(w_ref.dtype)                 # cast only at the MXU boundary
    qkv = lax.dot_general(
        w_ref[...], xc,
        dimension_numbers=(((1,), (0,)), ((), ())),
        preferred_element_type=jnp.float32)             # (2*c8 + C, N), f32 accumulate
    qkv = qkv + b_ref[...]                              # bias broadcast over spatial
    q_ref[...] = qkv[:c8, :].astype(q_ref.dtype)
    k_ref[...] = qkv[c8:2 * c8, :].astype(k_ref.dtype)
    v_ref[...] = qkv[2 * c8:, :].astype(v_ref.dtype)


def _attention_kernel(q_ref, k_ref, v_ref, x_ref, gamma_ref, o_ref, *, approx_recip):
    """One query-column tile of the spatial self-attention.

    q_ref: (C/8, TQ) query tile        (compute dtype)
    k_ref: (C/8, N)  all keys          (compute dtype, resident across tiles)
    v_ref: (C,   N)  all values        (compute dtype, resident across tiles)
    x_ref: (C,  TQ)  residual tile     (f32)
    o_ref: (C,  TQ)  output tile       (f32)
    """
    # energy[a, b] = sum_c q[c, a] * k[c, b]  == proj_query^T @ proj_key,
    # expressed via contracting dims so no transpose is materialized.
    energy = lax.dot_general(
        q_ref[...], k_ref[...],
        dimension_numbers=(((0,), (0,)), ((), ())),
        preferred_element_type=jnp.float32)             # (TQ, N)

    # Row softmax in f32 (numerically stable); normalization via EUP reciprocal.
    energy = energy - jnp.max(energy, axis=-1, keepdims=True)
    p = jnp.exp(energy)
    inv = pl.reciprocal(jnp.sum(p, axis=-1, keepdims=True), approx=approx_recip)
    attn = (p * inv).astype(v_ref.dtype)                # (TQ, N)

    # out[c, a] = sum_b v[c, b] * attn[a, b]  == proj_value @ attention^T.
    out = lax.dot_general(
        v_ref[...], attn,
        dimension_numbers=(((1,), (1,)), ((), ())),
        preferred_element_type=jnp.float32)             # (C, TQ)

    gamma = gamma_ref[0, 0]
    o_ref[...] = (gamma * out + x_ref[...].astype(jnp.float32)).astype(o_ref.dtype)


def selfpointbranch_forward(x_nchw, params, *, compute_dtype=jnp.bfloat16, tq=None):
    """x_nchw: (1, C, H, W) float32; params: dict of weights/biases/gamma.

    compute_dtype: MXU input dtype (bf16 recommended on v6e/v7x, f32 for exact).
    tq: query-tile width (must divide H*W); default picks a lane-dense multiple
        of 128 if one divides N, else a single full-width tile.
    """
    B, C, H, W = x_nchw.shape
    assert B == 1, "module forward assumes batch size 1 (views with leading 1)"
    assert C % 8 == 0
    N = H * W
    c8 = C // 8
    x2d = x_nchw.reshape(C, N)

    # Stack [Wq; Wk; Wv] / [bq; bk; bv] for the fused projection matmul.
    w_all = jnp.concatenate(
        [params["wq"], params["wk"], params["wv"]], axis=0).astype(compute_dtype)
    b_all = jnp.concatenate(
        [params["bq"], params["bk"], params["bv"]], axis=0
    ).reshape(-1, 1).astype(jnp.float32)
    gamma = params["gamma"].reshape(1, 1).astype(jnp.float32)

    vmem = pl.BlockSpec(memory_space=pltpu.MemorySpace.VMEM)

    # ---- Kernel 1: fused Q/K/V projection (computed once, not per tile) ----
    q, k, v = pl.pallas_call(
        functools.partial(_qkv_projection_kernel, c8=c8),
        out_shape=(jax.ShapeDtypeStruct((c8, N), compute_dtype),
                   jax.ShapeDtypeStruct((c8, N), compute_dtype),
                   jax.ShapeDtypeStruct((C, N), compute_dtype)),
        in_specs=[vmem, vmem, vmem],
        out_specs=(vmem, vmem, vmem),
        compiler_params=pltpu.CompilerParams(vmem_limit_bytes=_VMEM_LIMIT_BYTES),
    )(x2d, w_all, b_all)

    # ---- Kernel 2: query-tiled attention + residual ----
    if tq is None:
        tq = next((t for t in (512, 256, 128) if N % t == 0), N)
    assert N % tq == 0, f"tq={tq} must divide N={N}"
    num_tiles = N // tq
    approx_recip = jnp.dtype(compute_dtype) != jnp.dtype(jnp.float32)

    out2d = pl.pallas_call(
        functools.partial(_attention_kernel, approx_recip=approx_recip),
        out_shape=jax.ShapeDtypeStruct((C, N), x_nchw.dtype),
        grid=(num_tiles,),
        in_specs=[
            pl.BlockSpec((c8, tq), lambda i: (0, i)),    # q: query-column tile
            pl.BlockSpec((c8, N), lambda i: (0, 0)),     # k: full, resident
            pl.BlockSpec((C, N), lambda i: (0, 0)),      # v: full, resident
            pl.BlockSpec((C, tq), lambda i: (0, i)),     # x: residual tile
            pl.BlockSpec((1, 1), lambda i: (0, 0)),      # gamma scalar
        ],
        out_specs=pl.BlockSpec((C, tq), lambda i: (0, i)),
        # x tile i is consumed in the same grid step that produces output tile i,
        # and tiles are disjoint across steps/cores -> aliasing is safe.
        input_output_aliases={3: 0},
        compiler_params=pltpu.CompilerParams(
            dimension_semantics=("parallel",),
            vmem_limit_bytes=_VMEM_LIMIT_BYTES),
    )(q, k, v, x2d, gamma)

    return out2d.reshape(B, C, H, W)


def reference_forward(x_nchw, params):
    """Pure-JAX f32 reference mirroring the PyTorch forward."""
    B, C, H, W = x_nchw.shape
    N = H * W
    x2d = x_nchw.reshape(C, N).astype(jnp.float32)
    q = params["wq"] @ x2d + params["bq"][:, None]
    k = params["wk"] @ x2d + params["bk"][:, None]
    v = params["wv"] @ x2d + params["bv"][:, None]
    energy = q.T @ k
    attention = jax.nn.softmax(energy, axis=-1)
    out = v @ attention.T
    res = params["gamma"][0] * out + x2d
    return res.reshape(B, C, H, W)


def init_params(key, in_dim):
    """Deterministic synthetic init.  Module __init__ shapes:
       query/key conv: (in_dim//8, in_dim, 1, 1), value conv: (in_dim, in_dim, 1, 1),
       gamma: (1,).  (Module inits gamma=0; use a nonzero value so the attention
       path is actually exercised numerically.)"""
    c8 = in_dim // 8
    ks = jax.random.split(key, 6)
    scale_qk = float(in_dim) ** -0.75
    scale_v = float(in_dim) ** -0.5
    return {
        "wq": jax.random.normal(ks[0], (c8, in_dim), jnp.float32) * scale_qk,
        "bq": jax.random.normal(ks[1], (c8,), jnp.float32) * 0.01,
        "wk": jax.random.normal(ks[2], (c8, in_dim), jnp.float32) * scale_qk,
        "bk": jax.random.normal(ks[3], (c8,), jnp.float32) * 0.01,
        "wv": jax.random.normal(ks[4], (in_dim, in_dim), jnp.float32) * scale_v,
        "bv": jax.random.normal(ks[5], (in_dim,), jnp.float32) * 0.01,
        "gamma": jnp.array([0.25], jnp.float32),
    }


if __name__ == "__main__":
    key = jax.random.PRNGKey(0)
    k_x, k_p, k_x2, k_p2 = jax.random.split(key, 4)

    # Test 1: small shape, exact f32 path, two lane-dense query tiles (TQ=128).
    C, H, W = 64, 16, 16                      # N = 256
    x = jax.random.normal(k_x, (1, C, H, W), jnp.float32)
    params = init_params(k_p, C)
    ref = reference_forward(x, params)

    out_f32 = jax.block_until_ready(
        selfpointbranch_forward(x, params, compute_dtype=jnp.float32, tq=128))
    np.testing.assert_allclose(np.asarray(out_f32), np.asarray(ref),
                               rtol=2e-4, atol=2e-4)

    # Test 2: same shape, bf16 MXU path (v6e/v7x optimized), tiled query axis.
    out_bf16 = jax.block_until_ready(
        selfpointbranch_forward(x, params, compute_dtype=jnp.bfloat16, tq=128))
    np.testing.assert_allclose(np.asarray(out_bf16), np.asarray(ref),
                               rtol=5e-2, atol=5e-2)

    # Test 3: the deployment shape hardcoded in the PyTorch module (256 ch, 21x21).
    # N = 441 is not a multiple of 128 -> single full-width tile fallback.
    C2, H2, W2 = 256, 21, 21
    x2 = jax.random.normal(k_x2, (1, C2, H2, W2), jnp.float32)
    params2 = init_params(k_p2, C2)
    out2 = jax.block_until_ready(
        selfpointbranch_forward(x2, params2, compute_dtype=jnp.bfloat16))
    ref2 = reference_forward(x2, params2)
    np.testing.assert_allclose(np.asarray(out2), np.asarray(ref2),
                               rtol=5e-2, atol=5e-2)

    print("KERNEL_OK")
</pallas_src>

<mosaic_0001>
module attributes {stable_mosaic.version = 11 : i64} {
  func.func @_qkv_projection_kernel(%arg0: memref<64x256xf32, #tpu.memory_space<vmem>>, %arg1: memref<80x64xf32, #tpu.memory_space<vmem>>, %arg2: memref<80x1xf32, #tpu.memory_space<vmem>>, %arg3: memref<8x256xf32, #tpu.memory_space<vmem>>, %arg4: memref<8x256xf32, #tpu.memory_space<vmem>>, %arg5: memref<64x256xf32, #tpu.memory_space<vmem>>) attributes {dimension_semantics = [], scalar_prefetch = 0 : i64, scratch_operands = 0 : i64, tpu.core_type = #tpu.core_type<tc>} {
    %c0 = arith.constant 0 : index
    %c0_0 = arith.constant 0 : index
    %0 = vector.load %arg0[%c0, %c0_0] : memref<64x256xf32, #tpu.memory_space<vmem>>, vector<64x256xf32>
    %c0_1 = arith.constant 0 : index
    %c0_2 = arith.constant 0 : index
    %1 = vector.load %arg1[%c0_1, %c0_2] : memref<80x64xf32, #tpu.memory_space<vmem>>, vector<80x64xf32>
    %cst = arith.constant dense<0.000000e+00> : vector<80x256xf32>
    %2 = tpu.matmul %1, %0, %cst {dimension_numbers = #tpu.dot_dimension_numbers<[1], [0], [0], [1], [0, 0, 1, 1], [], []>} : vector<80x64xf32>, vector<64x256xf32>, vector<80x256xf32> -> vector<80x256xf32>
    %c0_3 = arith.constant 0 : index
    %c0_4 = arith.constant 0 : index
    %3 = vector.load %arg2[%c0_3, %c0_4] : memref<80x1xf32, #tpu.memory_space<vmem>>, vector<80x1xf32>
    %4 = vector.broadcast %3 : vector<80x1xf32> to vector<80x256xf32>
    %5 = arith.addf %2, %4 : vector<80x256xf32>
    %6 = vector.extract_strided_slice %5 {offsets = [0, 0], sizes = [8, 256], strides = [1, 1]} : vector<80x256xf32> to vector<8x256xf32>
    %c0_5 = arith.constant 0 : index
    %c0_6 = arith.constant 0 : index
    %7 = vector.load %arg3[%c0_5, %c0_6] : memref<8x256xf32, #tpu.memory_space<vmem>>, vector<8x256xf32>
    tpu.vector_store %arg3[%c0_5, %c0_6], %6 {strides = array<i32>} : memref<8x256xf32, #tpu.memory_space<vmem>>, vector<8x256xf32>,
    %8 = vector.extract_strided_slice %5 {offsets = [8, 0], sizes = [8, 256], strides = [1, 1]} : vector<80x256xf32> to vector<8x256xf32>
    %c0_7 = arith.constant 0 : index
    %c0_8 = arith.constant 0 : index
    %9 = vector.load %arg4[%c0_7, %c0_8] : memref<8x256xf32, #tpu.memory_space<vmem>>, vector<8x256xf32>
    tpu.vector_store %arg4[%c0_7, %c0_8], %8 {strides = array<i32>} : memref<8x256xf32, #tpu.memory_space<vmem>>, vector<8x256xf32>,
    %10 = vector.extract_strided_slice %5 {offsets = [16, 0], sizes = [64, 256], strides = [1, 1]} : vector<80x256xf32> to vector<64x256xf32>
    %c0_9 = arith.constant 0 : index
    %c0_10 = arith.constant 0 : index
    %11 = vector.load %arg5[%c0_9, %c0_10] : memref<64x256xf32, #tpu.memory_space<vmem>>, vector<64x256xf32>
    tpu.vector_store %arg5[%c0_9, %c0_10], %10 {strides = array<i32>} : memref<64x256xf32, #tpu.memory_space<vmem>>, vector<64x256xf32>,
    return
  }
}

</mosaic_0001>

<llo_original>
// kernel: tpu_custom_call.1
$region0: #{tpu_custom_call.1}
  #allocation0 [shape = 'u32[]', space=smem, size = 0x4, offset = 0x4, fixed_abs, tag = 'smem constant byte address 0x4 - core index']
  #allocation1 [shape = 'u32[144,128]{1,0:T(1,128)}', space=vmem, size = 0x12000, scoped, tag = 'internal scratch']
  %s0 = inlined_call_operand.vmem [shape: f32[64,256], index: 0, kind: input, shape index: {}]
  %s1 = inlined_call_operand.vmem [shape: f32[80,64], index: 1, kind: input, shape index: {}]
  %s2 = inlined_call_operand.vmem [shape: f32[80,1], index: 2, kind: input, shape index: {}]
  %s3 = inlined_call_operand.hbm [shape: f32[8,256], index: 3, kind: output, shape index: {0}]
  %s4 = inlined_call_operand.hbm [shape: f32[8,256], index: 4, kind: output, shape index: {1}]
  %s5 = inlined_call_operand.hbm [shape: f32[64,256], index: 5, kind: output, shape index: {2}]
  %6 = xla_tuple %s3, %s4, %s5
  %s7 = sld [smem:[#allocation0]]
  $region38: #{tpu_custom_call.1} parent=0
    _
  %s9 = ssub.s32 1, %s7
  %s10 = scalar_select 0, %s9, %s7
  $region1: #{tpu_custom_call.1} parent=0
    #allocation2 [shape = 'u8[8192]{0}', space=vmem, size = 0x2000, scoped, tag = 'output window, operand 0, single buffered']
    #allocation3 [shape = 's32[1]{0}', space=sflag, size = 0x4, scoped, tag = 'scoped memory for tpu_custom_call.1']
    #allocation4 [shape = 'u8[8192]{0}', space=vmem, size = 0x2000, scoped, tag = 'output window, operand 1, single buffered']
    #allocation5 [shape = 's32[1]{0}', space=sflag, size = 0x4, scoped, tag = 'scoped memory for tpu_custom_call.1']
    #allocation6 [shape = 'u8[65536]{0}', space=vmem, size = 0x10000, scoped, tag = 'output window, operand 2, single buffered']
    %11 = vsyncpa [#allocation3], 0
    %12 = vsyncpa [#allocation5], 0
    // Predicated region
    $region2: #{tpu_custom_call.1} parent=1 // pred_check
      _
    $region3: #{tpu_custom_call.1} parent=1 // pred_check_branch
      %14 = sbr.rel (0) target = $region5
    $region4: #{tpu_custom_call.1} parent=1 // pred_region
      _
    $region5: #{tpu_custom_call.1} parent=1 // pred_fallthru
      _
    // Predicated region
    $region6: #{tpu_custom_call.1} parent=1 // pred_check
      _
    $region7: #{tpu_custom_call.1} parent=1 // pred_check_branch
      %16 = sbr.rel (0) target = $region9
    $region8: #{tpu_custom_call.1} parent=1 // pred_region
      _
    $region9: #{tpu_custom_call.1} parent=1 // pred_fallthru
      _
    // Predicated region
    $region10: #{tpu_custom_call.1} parent=1 // pred_check
      _
    $region11: #{tpu_custom_call.1} parent=1 // pred_check_branch
      %18 = sbr.rel (0) target = $region13
    $region12: #{tpu_custom_call.1} parent=1 // pred_region
      _
    $region13: #{tpu_custom_call.1} parent=1 // pred_fallthru
      _
    %v19 = vld [vmem:[%s0] sm:$0xff]
    %v20 = vld [vmem:[%s0 + $0x8] sm:$0xff]
    %v21 = vld [vmem:[%s0 + $0x10] sm:$0xff]
    %v22 = vld [vmem:[%s0 + $0x18] sm:$0xff]
    %v23 = vld [vmem:[%s0 + $0x20] sm:$0xff]
    %v24 = vld [vmem:[%s0 + $0x28] sm:$0xff]
    %v25 = vld [vmem:[%s0 + $0x30] sm:$0xff]
    %v26 = vld [vmem:[%s0 + $0x38] sm:$0xff]
    %v27 = vld [vmem:[%s0 + $0x40] sm:$0xff]
    %v28 = vld [vmem:[%s0 + $0x48] sm:$0xff]
    %v29 = vld [vmem:[%s0 + $0x50] sm:$0xff]
    %v30 = vld [vmem:[%s0 + $0x58] sm:$0xff]
    %v31 = vld [vmem:[%s0 + $0x60] sm:$0xff]
    %v32 = vld [vmem:[%s0 + $0x68] sm:$0xff]
    %v33 = vld [vmem:[%s0 + $0x70] sm:$0xff]
    %v34 = vld [vmem:[%s0 + $0x78] sm:$0xff]
    %v35 = vld [vmem:[%s1] sm:$0xff]
    %v36 = vld [vmem:[%s1 + $0x8] sm:$0xff]
    %v37 = vld [vmem:[%s1 + $0x10] sm:$0xff]
    %v38 = vld [vmem:[%s1 + $0x18] sm:$0xff]
    %v39 = vld [vmem:[%s1 + $0x20] sm:$0xff]
    %v40 = vld [vmem:[%s1 + $0x28] sm:$0xff]
    %v41 = vld [vmem:[%s1 + $0x30] sm:$0xff]
    %v42 = vld [vmem:[%s1 + $0x38] sm:$0xff]
    %v43 = vld [vmem:[%s1 + $0x40] sm:$0xff]
    %v44 = vld [vmem:[%s1 + $0x48] sm:$0xff]
    %v45 = vld [vmem:[%s2] sm:$0xff]
    %v46 = vld [vmem:[%s2 + $0x8] sm:$0xff]
    %v47 = vld [vmem:[%s2 + $0x10] sm:$0xff]
    %v48 = vld [vmem:[%s2 + $0x18] sm:$0xff]
    %v49 = vld [vmem:[%s2 + $0x20] sm:$0xff]
    %v50 = vld [vmem:[%s2 + $0x28] sm:$0xff]
    %v51 = vld [vmem:[%s2 + $0x30] sm:$0xff]
    %v52 = vld [vmem:[%s2 + $0x38] sm:$0xff]
    %v53 = vld [vmem:[%s2 + $0x40] sm:$0xff]
    %v54 = vld [vmem:[%s2 + $0x48] sm:$0xff]
    %56 = vset.pattern.permute.xlu0 0
    %57 = vperm.xlu0 %56, %v45
    %v58 = vpop.permute.xlu0 %57
    %61 = vset.pattern.permute.xlu0 0
    %62 = vperm.xlu0 %61, %v46
    %v63 = vpop.permute.xlu0 %62
    %66 = vset.pattern.permute.xlu0 0
    %67 = vperm.xlu0 %66, %v47
    %v68 = vpop.permute.xlu0 %67
    %71 = vset.pattern.permute.xlu0 0
    %72 = vperm.xlu0 %71, %v48
    %v73 = vpop.permute.xlu0 %72
    %76 = vset.pattern.permute.xlu0 0
    %77 = vperm.xlu0 %76, %v49
    %v78 = vpop.permute.xlu0 %77
    %81 = vset.pattern.permute.xlu0 0
    %82 = vperm.xlu0 %81, %v50
    %v83 = vpop.permute.xlu0 %82
    %86 = vset.pattern.permute.xlu0 0
    %87 = vperm.xlu0 %86, %v51
    %v88 = vpop.permute.xlu0 %87
    %91 = vset.pattern.permute.xlu0 0
    %92 = vperm.xlu0 %91, %v52
    %v93 = vpop.permute.xlu0 %92
    %96 = vset.pattern.permute.xlu0 0
    %97 = vperm.xlu0 %96, %v53
    %v98 = vpop.permute.xlu0 %97
    %101 = vset.pattern.permute.xlu0 0
    %102 = vperm.xlu0 %101, %v54
    %v103 = vpop.permute.xlu0 %102
    %vm105 = vcmask 523264
    %v107 = vsel %vm105, %v35, 0
    %v110 = vsel %vm105, %v36, 0
    %v113 = vsel %vm105, %v37, 0
    %v116 = vsel %vm105, %v38, 0
    %v119 = vsel %vm105, %v39, 0
    %v122 = vsel %vm105, %v40, 0
    %v125 = vsel %vm105, %v41, 0
    %v128 = vsel %vm105, %v42, 0
    %v131 = vsel %vm105, %v43, 0
    %v134 = vsel %vm105, %v44, 0
    %136 = vmatprep.subr.mxu0 %v20
    %137 = vmatpush1.msra.mxu0 %v19
    %138 = vmatprep.subr.mxu0 %v22
    %139 = vmatpush1.msra.mxu0 %v21
    %140 = vmatprep.subr.mxu0 %v24
    %141 = vmatpush1.msra.mxu0 %v23
    %142 = vmatprep.subr.mxu0 %v26
    %143 = vmatpush1.msra.mxu0 %v25
    %144 = vmatprep.subr.mxu0 %v28
    %145 = vmatpush1.msra.mxu0 %v27
    %146 = vmatprep.subr.mxu0 %v30
    %147 = vmatpush1.msra.mxu0 %v29
    %148 = vmatprep.subr.mxu0 %v32
    %149 = vmatpush1.msra.mxu0 %v31
    %150 = vmatprep.subr.mxu0 %v34
    %151 = vmatpush1.msra.mxu0 %v33
    %152 = vmatprep.subr.mxu0 0.0
    %153 = vmatpush1.msra.mxu0 0.0
    %154 = vmatprep.subr.mxu0 0.0
    %155 = vmatpush1.msra.mxu0 0.0
    %156 = vmatprep.subr.mxu0 0.0
    %157 = vmatpush1.msra.mxu0 0.0
    %158 = vmatprep.subr.mxu0 0.0
    %159 = vmatpush1.msra.mxu0 0.0
    %160 = vmatprep.subr.mxu0 0.0
    %161 = vmatpush1.msra.mxu0 0.0
    %162 = vmatprep.subr.mxu0 0.0
    %163 = vmatpush1.msra.mxu0 0.0
    %164 = vmatprep.subr.mxu0 0.0
    %165 = vmatpush1.msra.mxu0 0.0
    %166 = vmatprep.subr.mxu0 0.0
    %167 = vmatpush1.msra.mxu0 0.0
    %168 = vmatprep.subr.mxu0 0.0
    %169 = vmatpush1.msra.mxu0 0.0
    %170 = vmatprep.subr.mxu0 0.0
    %171 = vmatpush1.msra.mxu0 0.0
    %172 = vmatprep.subr.mxu0 0.0
    %173 = vmatpush1.msra.mxu0 0.0
    %174 = vmatprep.subr.mxu0 0.0
    %175 = vmatpush1.msra.mxu0 0.0
    %176 = vmatprep.subr.mxu0 0.0
    %177 = vmatpush1.msra.mxu0 0.0
    %178 = vmatprep.subr.mxu0 0.0
    %179 = vmatpush1.msra.mxu0 0.0
    %180 = vmatprep.subr.mxu0 0.0
    %181 = vmatpush1.msra.mxu0 0.0
    %182 = vmatprep.subr.mxu0 0.0
    %183 = vmatpush1.msra.mxu0 0.0
    %184 = vmatprep.subr.mxu0 0.0
    %185 = vmatpush1.msra.mxu0 0.0
    %186 = vmatprep.subr.mxu0 0.0
    %187 = vmatpush1.msra.mxu0 0.0
    %188 = vmatprep.subr.mxu0 0.0
    %189 = vmatpush1.msra.mxu0 0.0
    %190 = vmatprep.subr.mxu0 0.0
    %191 = vmatpush1.msra.mxu0 0.0
    %192 = vmatprep.subr.mxu0 0.0
    %193 = vmatpush1.msra.mxu0 0.0
    %194 = vmatprep.subr.mxu0 0.0
    %195 = vmatpush1.msra.mxu0 0.0
    %196 = vmatprep.subr.mxu0 0.0
    %197 = vmatpush1.msra.mxu0 0.0
    %198 = vmatprep.subr.mxu0 0.0
    %199 = vmatpush1.msra.mxu0 0.0
    %200 = vmatprep.mubr.f32.mxu0 0.0
    %201 = vmatmul.mubr.f32.gmra.mrb[0].mxu0 %v107
    %v202 = vpop.f32.mrb[0].mxu0
    %v203 = vadd.f32 %v58, %v202
    %v204 = vpop.f32.mrb[0].mxu0
    %v205 = vadd.f32 %v58, %v204
    %206 = vmatprep.mubr.f32.mxu0 0.0
    %207 = vmatmul.mubr.f32.gmra.mrb[0].mxu0 %v110
    %v208 = vpop.f32.mrb[0].mxu0
    %v209 = vadd.f32 %v63, %v208
    %v210 = vpop.f32.mrb[0].mxu0
    %v211 = vadd.f32 %v63, %v210
    %212 = vmatprep.mubr.f32.mxu0 0.0
    %213 = vmatmul.mubr.f32.gmra.mrb[0].mxu0 %v113
    %v214 = vpop.f32.mrb[0].mxu0
    %v215 = vadd.f32 %v68, %v214
    %v216 = vpop.f32.mrb[0].mxu0
    %v217 = vadd.f32 %v68, %v216
    %218 = vmatprep.mubr.f32.mxu0 0.0
    %219 = vmatmul.mubr.f32.gmra.mrb[0].mxu0 %v116
    %v220 = vpop.f32.mrb[0].mxu0
    %v221 = vadd.f32 %v73, %v220
    %v222 = vpop.f32.mrb[0].mxu0
    %v223 = vadd.f32 %v73, %v222
    %224 = vmatprep.mubr.f32.mxu0 0.0
    %225 = vmatmul.mubr.f32.gmra.mrb[0].mxu0 %v119
    %v226 = vpop.f32.mrb[0].mxu0
    %v227 = vadd.f32 %v78, %v226
    %v228 = vpop.f32.mrb[0].mxu0
    %v229 = vadd.f32 %v78, %v228
    %230 = vmatprep.mubr.f32.mxu0 0.0
    %231 = vmatmul.mubr.f32.gmra.mrb[0].mxu0 %v122
    %v232 = vpop.f32.mrb[0].mxu0
    %v233 = vadd.f32 %v83, %v232
    %v234 = vpop.f32.mrb[0].mxu0
    %v235 = vadd.f32 %v83, %v234
    %236 = vmatprep.mubr.f32.mxu0 0.0
    %237 = vmatmul.mubr.f32.gmra.mrb[0].mxu0 %v125
    %v238 = vpop.f32.mrb[0].mxu0
    %v239 = vadd.f32 %v88, %v238
    %v240 = vpop.f32.mrb[0].mxu0
    %v241 = vadd.f32 %v88, %v240
    %242 = vmatprep.mubr.f32.mxu0 0.0
    %243 = vmatmul.mubr.f32.gmra.mrb[0].mxu0 %v128
    %v244 = vpop.f32.mrb[0].mxu0
    %v245 = vadd.f32 %v93, %v244
    %v246 = vpop.f32.mrb[0].mxu0
    %v247 = vadd.f32 %v93, %v246
    %248 = vmatprep.mubr.f32.mxu0 0.0
    %249 = vmatmul.mubr.f32.gmra.mrb[0].mxu0 %v131
    %v250 = vpop.f32.mrb[0].mxu0
    %v251 = vadd.f32 %v98, %v250
    %v252 = vpop.f32.mrb[0].mxu0
    %v253 = vadd.f32 %v98, %v252
    %254 = vmatprep.mubr.f32.mxu0 0.0
    %255 = vmatmul.mubr.f32.gmra.mrb[0].mxu0 %v134
    %v256 = vpop.f32.mrb[0].mxu0
    %v257 = vadd.f32 %v103, %v256
    %v258 = vpop.f32.mrb[0].mxu0
    %v259 = vadd.f32 %v103, %v258
    %260 = vdwg.mxu0
    %261 = vst [vmem:[#allocation2] sm:$0xff] %v203
    %262 = vst [vmem:[#allocation2 + $0x8] sm:$0xff] %v205
    %263 = vst [vmem:[#allocation4] sm:$0xff] %v209
    %264 = vst [vmem:[#allocation4 + $0x8] sm:$0xff] %v211
    %265 = vst [vmem:[#allocation6] sm:$0xff] %v215
    %266 = vst [vmem:[#allocation6 + $0x8] sm:$0xff] %v217
    %267 = vst [vmem:[#allocation6 + $0x10] sm:$0xff] %v221
    %268 = vst [vmem:[#allocation6 + $0x18] sm:$0xff] %v223
    %269 = vst [vmem:[#allocation6 + $0x20] sm:$0xff] %v227
    %270 = vst [vmem:[#allocation6 + $0x28] sm:$0xff] %v229
    %271 = vst [vmem:[#allocation6 + $0x30] sm:$0xff] %v233
    %272 = vst [vmem:[#allocation6 + $0x38] sm:$0xff] %v235
    %273 = vst [vmem:[#allocation6 + $0x40] sm:$0xff] %v239
    %274 = vst [vmem:[#allocation6 + $0x48] sm:$0xff] %v241
    %275 = vst [vmem:[#allocation6 + $0x50] sm:$0xff] %v245
    %276 = vst [vmem:[#allocation6 + $0x58] sm:$0xff] %v247
    %277 = vst [vmem:[#allocation6 + $0x60] sm:$0xff] %v251
    %278 = vst [vmem:[#allocation6 + $0x68] sm:$0xff] %v253
    %279 = vst [vmem:[#allocation6 + $0x70] sm:$0xff] %v257
    %280 = vst [vmem:[#allocation6 + $0x78] sm:$0xff] %v259
    // Predicated region
    $region14: #{tpu_custom_call.1} parent=1 // pred_check
      _
    $region15: #{tpu_custom_call.1} parent=1 // pred_check_branch
      %282 = sbr.rel (0) target = $region17
    $region16: #{tpu_custom_call.1} parent=1 // pred_region
      %s284 = ssub.s32 256, 256
      %285 = vsyncadd [#allocation3], %s284
      %s287 = sshll.u32 [#allocation2], 4
      %s288 = int_to_ptr.vmem [resolvable:$true] %s287
      %290 = dma.vmem_to_hbm [thread:$0]  %s288, 256, %s3, [#allocation3]
    $region17: #{tpu_custom_call.1} parent=1 // pred_fallthru
      _
    // Predicated region
    $region18: #{tpu_custom_call.1} parent=1 // pred_check
      _
    $region19: #{tpu_custom_call.1} parent=1 // pred_check_branch
      %292 = sbr.rel (0) target = $region21
    $region20: #{tpu_custom_call.1} parent=1 // pred_region
      %s294 = ssub.s32 256, 256
      %295 = vsyncadd [#allocation5], %s294
      %s297 = sshll.u32 [#allocation4], 4
      %s298 = int_to_ptr.vmem [resolvable:$true] %s297
      %300 = dma.vmem_to_hbm [thread:$0]  %s298, 256, %s4, [#allocation5]
    $region21: #{tpu_custom_call.1} parent=1 // pred_fallthru
      _
    // Predicated region
    $region22: #{tpu_custom_call.1} parent=1 // pred_check
      _
    $region23: #{tpu_custom_call.1} parent=1 // pred_check_branch
      %302 = sbr.rel (0) target = $region25
    $region24: #{tpu_custom_call.1} parent=1 // pred_region
      %s304 = ssub.s32 2048, 2048
      %305 = vsyncadd [#allocation5], %s304
      %s306 = sshll.u32 [#allocation6], 4
      %s307 = int_to_ptr.vmem [resolvable:$true] %s306
      %312 = dma.vmem_to_hbm [thread:$0]  %s307, 2048, %s5, [#allocation5], 256, 256, 16
    $region25: #{tpu_custom_call.1} parent=1 // pred_fallthru
      _
    // Predicated region
    $region26: #{tpu_custom_call.1} parent=1 // pred_check
      _
    $region27: #{tpu_custom_call.1} parent=1 // pred_check_branch
      %314 = sbr.rel (0) target = $region29
    $region28: #{tpu_custom_call.1} parent=1 // pred_region
      %315 = dma.done [#allocation3], 256
    $region29: #{tpu_custom_call.1} parent=1 // pred_fallthru
      _
    // Predicated region
    $region30: #{tpu_custom_call.1} parent=1 // pred_check
      _
    $region31: #{tpu_custom_call.1} parent=1 // pred_check_branch
      %317 = sbr.rel (0) target = $region33
    $region32: #{tpu_custom_call.1} parent=1 // pred_region
      %318 = dma.done [#allocation5], 256
    $region33: #{tpu_custom_call.1} parent=1 // pred_fallthru
      _
    // Predicated region
    $region34: #{tpu_custom_call.1} parent=1 // pred_check
      _
    $region35: #{tpu_custom_call.1} parent=1 // pred_check_branch
      %320 = sbr.rel (0) target = $region37
    $region36: #{tpu_custom_call.1} parent=1 // pred_region
      %321 = dma.done [#allocation5], 2048
    $region37: #{tpu_custom_call.1} parent=1 // pred_fallthru
      _
    %322 = vsyncpa [#allocation3], 1
    %323 = vsyncpa [#allocation5], 1

</llo_original>
